<compile_context>
chip_gen: v7x
topology: tpu7x:2x2x1
jax: 0.10.0
libtpu: 0.0.40
codegen_flags: <defaults>
</compile_context>

<pallas_src>
import jax
import jax.numpy as jnp
from jax.experimental import pallas as pl
from jax.experimental.pallas import tpu as pltpu

INPUT_NORM_CORRECTION = 1.0
_LANE = 128


# ----------------------------------------------------------------------------
# Kernel: lbo_loss (one tile of pairs)
# ----------------------------------------------------------------------------
def _lbo_loss_kernel(x1_ref, x2_ref, w_ref, b_ref, loss_ref):
    """x1/x2: (TB, D) f32 raw inputs; w: (D, C) bf16 folded+transposed weight;
    b: (1, C) f32 folded bias; loss: (TB, 128) f32 (loss broadcast on lanes)."""
    x1 = x1_ref[...]
    x2 = x2_ref[...]
    w = w_ref[...]
    b = b_ref[...]

    # model(self._normalize(inputs)): linear last layer; normalization is
    # folded into (w, b) on the host.  bf16 operands, f32 accumulation (MXU).
    dn = (((1,), (0,)), ((), ()))
    y1 = jax.lax.dot_general(x1.astype(jnp.bfloat16), w, dn,
                             preferred_element_type=jnp.float32) + b
    y2 = jax.lax.dot_general(x2.astype(jnp.bfloat16), w, dn,
                             preferred_element_type=jnp.float32) + b

    # prediction_values / predictions: max + first-index argmax over classes
    y1_j = jnp.max(y1, axis=1, keepdims=True)                       # (TB, 1)
    col = jax.lax.broadcasted_iota(jnp.int32, y1.shape, 1)          # (TB, C)
    big = jnp.int32(2 ** 30)
    j = jnp.min(jnp.where(y1 == y1_j, col, big), axis=1, keepdims=True)

    # y2_j = gather(y2, dim=1, index=j)
    onehot = (col == j).astype(jnp.float32)
    y2_j = jnp.sum(y2 * onehot, axis=1, keepdims=True)              # (TB, 1)

    margin1 = y1_j - y1                                             # (TB, C)
    margin2 = y2_j - y2                                             # (TB, C)

    # loss = -max_c |margin1 - margin2| / ||x1 - x2||_2
    # (reduce over classes first, then one rsqrt + multiply per row)
    m = jnp.max(jnp.abs(margin1 - margin2), axis=1, keepdims=True)  # (TB, 1)
    xd = x1 - x2
    # NOTE: rsqrt(0) -> inf, matching the unguarded divide in the PyTorch ref.
    inv_norm = jax.lax.rsqrt(jnp.sum(xd * xd, axis=1, keepdims=True))
    loss = -(m * inv_norm) * INPUT_NORM_CORRECTION                  # (TB, 1)

    # lane-padded write: unmasked full-lane stores; wrapper slices column 0.
    loss_ref[...] = jnp.broadcast_to(loss, loss_ref.shape)


def _choose_pair_tile(n_pairs, d):
    """Largest pair tile s.t. 2 inputs x 2 double-buffers x TB x D x 4B
    stays under ~32 MiB (safe on v7x's 64 MiB VMEM and v5e defaults)."""
    budget = 32 * 1024 * 1024
    for tb in (1024, 512, 256, 128):
        if n_pairs % tb == 0 and 16 * tb * d <= budget:
            return tb
    return n_pairs  # small problem: single full-extent block (always legal)


def lbo_loss_pallas(x_nchw, data_mean, data_std, w_fc, b_fc):
    """lbo_loss for a linear last-layer model; returns per-pair loss (N,)."""
    B, C, H, Wsp = x_nchw.shape
    D = C * H * Wsp
    N = B // 2
    n_cls = w_fc.shape[0]

    x = x_nchw.reshape(B, D).astype(jnp.float32)
    x1, x2 = x[:N], x[N:]

    # Fold normalization into the last layer (host-side, free layout plumbing).
    mean_f = jnp.broadcast_to(data_mean[:, None, None], (C, H, Wsp)).reshape(D)
    std_f = jnp.broadcast_to(data_std[:, None, None], (C, H, Wsp)).reshape(D)
    w32 = w_fc.astype(jnp.float32)
    w_t = (w32 / std_f[None, :]).T.astype(jnp.bfloat16)          # (D, C_out)
    b_fold = (b_fc.astype(jnp.float32)
              - (mean_f / std_f) @ w32.T).reshape(1, n_cls)      # (1, C_out)

    TB = _choose_pair_tile(N, D)
    grid = (N // TB,)

    loss_pad = pl.pallas_call(
        _lbo_loss_kernel,
        out_shape=jax.ShapeDtypeStruct((N, _LANE), jnp.float32),
        grid=grid,
        in_specs=[
            pl.BlockSpec((TB, D), lambda i: (i, 0)),       # x1 tile
            pl.BlockSpec((TB, D), lambda i: (i, 0)),       # x2 tile
            pl.BlockSpec((D, n_cls), lambda i: (0, 0)),    # folded W^T (resident)
            pl.BlockSpec((1, n_cls), lambda i: (0, 0)),    # folded bias
        ],
        out_specs=pl.BlockSpec((TB, _LANE), lambda i: (i, 0)),
        compiler_params=pltpu.CompilerParams(
            dimension_semantics=("parallel",),              # v7x: 2 TCs split pairs
            vmem_limit_bytes=48 * 1024 * 1024),             # < v7x 64 MiB physical
    )(x1, x2, w_t, b_fold)
    return loss_pad[:, 0]                                   # (N,)


# ----------------------------------------------------------------------------
# Kfc = max_{i<j} ||W_i - W_j||_2 on the ORIGINAL last-layer weight.
# 10x10 Gram matrix: too small for its own kernel (launch overhead > math),
# so it is left to plain JAX per the performance review.
# ----------------------------------------------------------------------------
def kfc_jax(w_fc):
    w = w_fc.astype(jnp.float32)
    g = w @ w.T
    d = jnp.diag(g)
    sq = jnp.maximum(d[:, None] + d[None, :] - 2.0 * g, 0.0)
    return jnp.sqrt(jnp.max(sq))


# ----------------------------------------------------------------------------
# References (mirror the kernel's bf16 matmul so the check is tight; otherwise
# identical to the PyTorch math).
# ----------------------------------------------------------------------------
def _lbo_loss_ref(x_nchw, data_mean, data_std, w_fc, b_fc):
    B, C, H, Wsp = x_nchw.shape
    D = C * H * Wsp
    N = B // 2
    x = x_nchw.reshape(B, D).astype(jnp.float32)
    mean_f = jnp.broadcast_to(data_mean[:, None, None], (C, H, Wsp)).reshape(D)
    std_f = jnp.broadcast_to(data_std[:, None, None], (C, H, Wsp)).reshape(D)
    w32 = w_fc.astype(jnp.float32)
    w_t = (w32 / std_f[None, :]).T.astype(jnp.bfloat16)
    b_fold = b_fc.astype(jnp.float32) - (mean_f / std_f) @ w32.T
    y = jnp.dot(x.astype(jnp.bfloat16), w_t,
                preferred_element_type=jnp.float32) + b_fold[None, :]
    y1, y2 = y[:N], y[N:]
    x1, x2 = x[:N], x[N:]
    j = jnp.argmax(y1, axis=1)
    y1_j = jnp.max(y1, axis=1)
    y2_j = jnp.take_along_axis(y2, j[:, None], axis=1)[:, 0]
    margin1 = y1_j[:, None] - y1
    margin2 = y2_j[:, None] - y2
    xnorm = jnp.sqrt(jnp.sum((x1 - x2) ** 2, axis=1))
    L = jnp.abs(margin1 - margin2) / xnorm[:, None] * INPUT_NORM_CORRECTION
    return -jnp.max(L, axis=1)


def _kfc_ref(w_fc):
    diffs = w_fc[:, None, :] - w_fc[None, :, :]
    return jnp.max(jnp.sqrt(jnp.sum(diffs ** 2, axis=-1)))


# ----------------------------------------------------------------------------
if __name__ == "__main__":
    key = jax.random.PRNGKey(0)
    B, C, H, Wsp = 8, 4, 16, 16        # batch must be even (pairs)
    NUM_CLASSES = 10
    D = C * H * Wsp

    k1, k2, k3 = jax.random.split(key, 3)
    # raw inputs already in [input_min_val, input_max_val] = [0, 1]
    x_nchw = jax.random.uniform(k1, (B, C, H, Wsp), jnp.float32)
    w_fc = 0.05 * jax.random.normal(k2, (NUM_CLASSES, D), jnp.float32)
    b_fc = 0.01 * jax.random.normal(k3, (NUM_CLASSES,), jnp.float32)
    data_mean = jnp.array([0.4914, 0.4822, 0.4465, 0.5000], jnp.float32)
    data_std = jnp.array([0.2470, 0.2435, 0.2616, 0.2500], jnp.float32)

    loss = jax.block_until_ready(
        lbo_loss_pallas(x_nchw, data_mean, data_std, w_fc, b_fc))
    kfc = jax.block_until_ready(kfc_jax(w_fc))

    # results dict equivalent (single forward pass, K=1.0 scale factor)
    max_loss = jnp.max(-loss)
    K = 1.0 * kfc
    results = dict(lower_bound=max_loss, bound_tightness=max_loss / K)
    jax.block_until_ready(results["bound_tightness"])

    # sanity checks against plain-JAX references
    loss_ref = _lbo_loss_ref(x_nchw, data_mean, data_std, w_fc, b_fc)
    kfc_ref = _kfc_ref(w_fc)
    assert jnp.allclose(loss, loss_ref, rtol=2e-3, atol=1e-5), (loss, loss_ref)
    assert jnp.allclose(kfc, kfc_ref, rtol=1e-4, atol=1e-5), (kfc, kfc_ref)
    assert jnp.all(jnp.isfinite(loss))

    print("KERNEL_OK")
</pallas_src>

<mosaic_0001>
module attributes {stable_mosaic.version = 11 : i64} {
  func.func @_lbo_loss_kernel(%arg0: i32, %arg1: memref<4x1024xf32, #tpu.memory_space<vmem>>, %arg2: memref<4x1024xf32, #tpu.memory_space<vmem>>, %arg3: memref<1024x10xbf16, #tpu.memory_space<vmem>>, %arg4: memref<1x10xf32, #tpu.memory_space<vmem>>, %arg5: memref<4x128xf32, #tpu.memory_space<vmem>>) attributes {dimension_semantics = [#tpu.dimension_semantics<parallel>], iteration_bounds = array<i64: 1>, scalar_prefetch = 0 : i64, scratch_operands = 0 : i64, tpu.core_type = #tpu.core_type<tc>, window_params = [{transform_indices = @transform_0, window_bounds = array<i64: 4, 1024>}, {transform_indices = @transform_1, window_bounds = array<i64: 4, 1024>}, {pipeline_mode = #tpu.pipeline_mode<synchronous>, transform_indices = @transform_2, window_bounds = array<i64: 1024, 10>}, {pipeline_mode = #tpu.pipeline_mode<synchronous>, transform_indices = @transform_3, window_bounds = array<i64: 1, 10>}, {transform_indices = @transform_4, window_bounds = array<i64: 4, 128>}]} {
    %c0 = arith.constant 0 : index
    %c0_0 = arith.constant 0 : index
    %0 = vector.load %arg1[%c0, %c0_0] : memref<4x1024xf32, #tpu.memory_space<vmem>>, vector<4x1024xf32>
    %c0_1 = arith.constant 0 : index
    %c0_2 = arith.constant 0 : index
    %1 = vector.load %arg2[%c0_1, %c0_2] : memref<4x1024xf32, #tpu.memory_space<vmem>>, vector<4x1024xf32>
    %c0_3 = arith.constant 0 : index
    %c0_4 = arith.constant 0 : index
    %2 = vector.load %arg3[%c0_3, %c0_4] : memref<1024x10xbf16, #tpu.memory_space<vmem>>, vector<1024x10xbf16>
    %c0_5 = arith.constant 0 : index
    %c0_6 = arith.constant 0 : index
    %3 = vector.load %arg4[%c0_5, %c0_6] : memref<1x10xf32, #tpu.memory_space<vmem>>, vector<1x10xf32>
    %4 = arith.truncf %0 : vector<4x1024xf32> to vector<4x1024xbf16>
    %cst = arith.constant dense<0.000000e+00> : vector<4x10xf32>
    %5 = tpu.matmul %4, %2, %cst {dimension_numbers = #tpu.dot_dimension_numbers<[1], [0], [0], [1], [0, 0, 1, 1], [], []>} : vector<4x1024xbf16>, vector<1024x10xbf16>, vector<4x10xf32> -> vector<4x10xf32>
    %6 = vector.broadcast %3 : vector<1x10xf32> to vector<4x10xf32>
    %7 = arith.addf %5, %6 : vector<4x10xf32>
    %8 = arith.truncf %1 : vector<4x1024xf32> to vector<4x1024xbf16>
    %cst_7 = arith.constant dense<0.000000e+00> : vector<4x10xf32>
    %9 = tpu.matmul %8, %2, %cst_7 {dimension_numbers = #tpu.dot_dimension_numbers<[1], [0], [0], [1], [0, 0, 1, 1], [], []>} : vector<4x1024xbf16>, vector<1024x10xbf16>, vector<4x10xf32> -> vector<4x10xf32>
    %10 = vector.broadcast %3 : vector<1x10xf32> to vector<4x10xf32>
    %11 = arith.addf %9, %10 : vector<4x10xf32>
    %cst_8 = arith.constant dense<0xFF800000> : vector<4xf32>
    %12 = vector.multi_reduction <maximumf>, %7, %cst_8 [1] : vector<4x10xf32> to vector<4xf32>
    %13 = vector.shape_cast %12 : vector<4xf32> to vector<4x1xf32>
    %14 = tpu.iota {dimensions = array<i32: 1>} : vector<4x10xi32>
    %15 = vector.broadcast %13 : vector<4x1xf32> to vector<4x10xf32>
    %16 = arith.cmpf oeq, %7, %15 : vector<4x10xf32>
    %c1073741824_i32 = arith.constant 1073741824 : i32
    %17 = vector.broadcast %c1073741824_i32 : i32 to vector<4x10xi32>
    %18 = arith.select %16, %14, %17 : vector<4x10xi1>, vector<4x10xi32>
    %cst_9 = arith.constant dense<2147483647> : vector<4xi32>
    %19 = vector.multi_reduction <minsi>, %18, %cst_9 [1] : vector<4x10xi32> to vector<4xi32>
    %20 = vector.shape_cast %19 : vector<4xi32> to vector<4x1xi32>
    %21 = vector.broadcast %20 : vector<4x1xi32> to vector<4x10xi32>
    %22 = arith.cmpi eq, %14, %21 : vector<4x10xi32>
    %23 = arith.extui %22 : vector<4x10xi1> to vector<4x10xi32>
    %24 = arith.sitofp %23 : vector<4x10xi32> to vector<4x10xf32>
    %25 = arith.mulf %11, %24 : vector<4x10xf32>
    %cst_10 = arith.constant dense<0.000000e+00> : vector<4xf32>
    %26 = vector.multi_reduction <add>, %25, %cst_10 [1] : vector<4x10xf32> to vector<4xf32>
    %27 = vector.shape_cast %26 : vector<4xf32> to vector<4x1xf32>
    %28 = vector.broadcast %13 : vector<4x1xf32> to vector<4x10xf32>
    %29 = arith.subf %28, %7 : vector<4x10xf32>
    %30 = vector.broadcast %27 : vector<4x1xf32> to vector<4x10xf32>
    %31 = arith.subf %30, %11 : vector<4x10xf32>
    %32 = arith.subf %29, %31 : vector<4x10xf32>
    %33 = math.absf %32 : vector<4x10xf32>
    %cst_11 = arith.constant dense<0xFF800000> : vector<4xf32>
    %34 = vector.multi_reduction <maximumf>, %33, %cst_11 [1] : vector<4x10xf32> to vector<4xf32>
    %35 = vector.shape_cast %34 : vector<4xf32> to vector<4x1xf32>
    %36 = arith.subf %0, %1 : vector<4x1024xf32>
    %37 = arith.mulf %36, %36 : vector<4x1024xf32>
    %cst_12 = arith.constant dense<0.000000e+00> : vector<4xf32>
    %38 = vector.multi_reduction <add>, %37, %cst_12 [1] : vector<4x1024xf32> to vector<4xf32>
    %39 = vector.shape_cast %38 : vector<4xf32> to vector<4x1xf32>
    %40 = math.rsqrt %39 : vector<4x1xf32>
    %41 = arith.mulf %35, %40 : vector<4x1xf32>
    %cst_13 = arith.constant 0.000000e+00 : f32
    %42 = vector.broadcast %cst_13 : f32 to vector<4x1xf32>
    %43 = arith.subf %42, %41 : vector<4x1xf32>
    %cst_14 = arith.constant 1.000000e+00 : f32
    %44 = vector.broadcast %cst_14 : f32 to vector<4x1xf32>
    %45 = arith.mulf %43, %44 : vector<4x1xf32>
    %46 = vector.shape_cast %45 : vector<4x1xf32> to vector<4x1xf32>
    %47 = vector.broadcast %46 : vector<4x1xf32> to vector<4x128xf32>
    %c0_15 = arith.constant 0 : index
    %c0_16 = arith.constant 0 : index
    %48 = vector.load %arg5[%c0_15, %c0_16] : memref<4x128xf32, #tpu.memory_space<vmem>>, vector<4x128xf32>
    tpu.vector_store %arg5[%c0_15, %c0_16], %47 {strides = array<i32>} : memref<4x128xf32, #tpu.memory_space<vmem>>, vector<4x128xf32>,
    return
  }
  func.func @transform_0(%arg0: i32) -> (i32, i32) {
    %c0_i32 = arith.constant 0 : i32
    %c0_i32_0 = arith.constant 0 : i32
    return %arg0, %c0_i32 : i32, i32
  }
  func.func @transform_1(%arg0: i32) -> (i32, i32) {
    %c0_i32 = arith.constant 0 : i32
    %c0_i32_0 = arith.constant 0 : i32
    return %arg0, %c0_i32 : i32, i32
  }
  func.func @transform_2(%arg0: i32) -> (i32, i32) {
    %c0_i32 = arith.constant 0 : i32
    %c0_i32_0 = arith.constant 0 : i32
    %c0_i32_1 = arith.constant 0 : i32
    return %c0_i32, %c0_i32_0 : i32, i32
  }
  func.func @transform_3(%arg0: i32) -> (i32, i32) {
    %c0_i32 = arith.constant 0 : i32
    %c0_i32_0 = arith.constant 0 : i32
    %c0_i32_1 = arith.constant 0 : i32
    return %c0_i32, %c0_i32_0 : i32, i32
  }
  func.func @transform_4(%arg0: i32) -> (i32, i32) {
    %c0_i32 = arith.constant 0 : i32
    %c0_i32_0 = arith.constant 0 : i32
    return %arg0, %c0_i32 : i32, i32
  }
}

</mosaic_0001>

<llo_original>
// kernel: tpu_custom_call.1
$region0: #{tpu_custom_call.1}
  #allocation0 [shape = 'u32[]', space=smem, size = 0x4, offset = 0x4, fixed_abs, tag = 'smem constant byte address 0x4 - core index']
  #allocation1 [shape = 'u32[144,128]{1,0:T(1,128)}', space=vmem, size = 0x12000, scoped, tag = 'internal scratch']
  %s0 = inlined_call_operand.vmem [shape: f32[4,1024], index: 0, kind: input, shape index: {}]
  %s1 = inlined_call_operand.vmem [shape: f32[4,1024], index: 1, kind: input, shape index: {}]
  %s2 = inlined_call_operand.vmem [shape: bf16[1024,10], index: 2, kind: input, shape index: {}]
  %s3 = inlined_call_operand.vmem [shape: f32[1,10], index: 3, kind: input, shape index: {}]
  %s4 = inlined_call_operand.hbm [shape: f32[4,128], index: 4, kind: output, shape index: {}]
  %s5 = sld [smem:[#allocation0]]
  $region26: #{tpu_custom_call.1} parent=0
    _
  %s7 = ssub.s32 1, %s5
  %s8 = scalar_select 0, %s7, %s5
  $region1: #{tpu_custom_call.1} parent=0
    #allocation2 [shape = 'u8[2048]{0}', space=vmem, size = 0x800, scoped, tag = 'output window, operand 0, single buffered']
    #allocation3 [shape = 's32[1]{0}', space=sflag, size = 0x4, scoped, tag = 'scoped memory for tpu_custom_call.1']
    %9 = vsyncpa [#allocation3], 0
    // Predicated region
    $region2: #{tpu_custom_call.1} parent=1 // pred_check
      _
    $region3: #{tpu_custom_call.1} parent=1 // pred_check_branch
      %11 = sbr.rel (0) target = $region5
    $region4: #{tpu_custom_call.1} parent=1 // pred_region
      _
    $region5: #{tpu_custom_call.1} parent=1 // pred_fallthru
      _
    // Predicated region
    $region6: #{tpu_custom_call.1} parent=1 // pred_check
      _
    $region7: #{tpu_custom_call.1} parent=1 // pred_check_branch
      %13 = sbr.rel (0) target = $region9
    $region8: #{tpu_custom_call.1} parent=1 // pred_region
      _
    $region9: #{tpu_custom_call.1} parent=1 // pred_fallthru
      _
    // Predicated region
    $region10: #{tpu_custom_call.1} parent=1 // pred_check
      _
    $region11: #{tpu_custom_call.1} parent=1 // pred_check_branch
      %15 = sbr.rel (0) target = $region13
    $region12: #{tpu_custom_call.1} parent=1 // pred_region
      _
    $region13: #{tpu_custom_call.1} parent=1 // pred_fallthru
      _
    // Predicated region
    $region14: #{tpu_custom_call.1} parent=1 // pred_check
      _
    $region15: #{tpu_custom_call.1} parent=1 // pred_check_branch
      %17 = sbr.rel (0) target = $region17
    $region16: #{tpu_custom_call.1} parent=1 // pred_region
      _
    $region17: #{tpu_custom_call.1} parent=1 // pred_fallthru
      _
    %v19 = vld [vmem:[%s0] sm:$0xff]
    %v20 = vld [vmem:[%s0 + $0x8] sm:$0xff]
    %v21 = vld [vmem:[%s0 + $0x10] sm:$0xff]
    %v22 = vld [vmem:[%s0 + $0x18] sm:$0xff]
    %v23 = vld [vmem:[%s1] sm:$0xff]
    %v24 = vld [vmem:[%s1 + $0x8] sm:$0xff]
    %v25 = vld [vmem:[%s1 + $0x10] sm:$0xff]
    %v26 = vld [vmem:[%s1 + $0x18] sm:$0xff]
    %v27 = vld [vmem:[%s2] sm:$0xf]
    %v28 = vld [vmem:[%s2 + $0x4] sm:$0xf]
    %v29 = vld [vmem:[%s2 + $0x8] sm:$0xf]
    %v30 = vld [vmem:[%s2 + $0xc] sm:$0xf]
    %v31 = vld [vmem:[%s2 + $0x10] sm:$0xf]
    %v32 = vld [vmem:[%s2 + $0x14] sm:$0xf]
    %v33 = vld [vmem:[%s2 + $0x18] sm:$0xf]
    %v34 = vld [vmem:[%s2 + $0x1c] sm:$0xf]
    %v35 = vld [vmem:[%s2 + $0x20] sm:$0xf]
    %v36 = vld [vmem:[%s2 + $0x24] sm:$0xf]
    %v37 = vld [vmem:[%s2 + $0x28] sm:$0xf]
    %v38 = vld [vmem:[%s2 + $0x2c] sm:$0xf]
    %v39 = vld [vmem:[%s2 + $0x30] sm:$0xf]
    %v40 = vld [vmem:[%s2 + $0x34] sm:$0xf]
    %v41 = vld [vmem:[%s2 + $0x38] sm:$0xf]
    %v42 = vld [vmem:[%s2 + $0x3c] sm:$0xf]
    %v43 = vld [vmem:[%s2 + $0x40] sm:$0xf]
    %v44 = vld [vmem:[%s2 + $0x44] sm:$0xf]
    %v45 = vld [vmem:[%s2 + $0x48] sm:$0xf]
    %v46 = vld [vmem:[%s2 + $0x4c] sm:$0xf]
    %v47 = vld [vmem:[%s2 + $0x50] sm:$0xf]
    %v48 = vld [vmem:[%s2 + $0x54] sm:$0xf]
    %v49 = vld [vmem:[%s2 + $0x58] sm:$0xf]
    %v50 = vld [vmem:[%s2 + $0x5c] sm:$0xf]
    %v51 = vld [vmem:[%s2 + $0x60] sm:$0xf]
    %v52 = vld [vmem:[%s2 + $0x64] sm:$0xf]
    %v53 = vld [vmem:[%s2 + $0x68] sm:$0xf]
    %v54 = vld [vmem:[%s2 + $0x6c] sm:$0xf]
    %v55 = vld [vmem:[%s2 + $0x70] sm:$0xf]
    %v56 = vld [vmem:[%s2 + $0x74] sm:$0xf]
    %v57 = vld [vmem:[%s2 + $0x78] sm:$0xf]
    %v58 = vld [vmem:[%s2 + $0x7c] sm:$0xf]
    %v59 = vld [vmem:[%s2 + $0x80] sm:$0xf]
    %v60 = vld [vmem:[%s2 + $0x84] sm:$0xf]
    %v61 = vld [vmem:[%s2 + $0x88] sm:$0xf]
    %v62 = vld [vmem:[%s2 + $0x8c] sm:$0xf]
    %v63 = vld [vmem:[%s2 + $0x90] sm:$0xf]
    %v64 = vld [vmem:[%s2 + $0x94] sm:$0xf]
    %v65 = vld [vmem:[%s2 + $0x98] sm:$0xf]
    %v66 = vld [vmem:[%s2 + $0x9c] sm:$0xf]
    %v67 = vld [vmem:[%s2 + $0xa0] sm:$0xf]
    %v68 = vld [vmem:[%s2 + $0xa4] sm:$0xf]
    %v69 = vld [vmem:[%s2 + $0xa8] sm:$0xf]
    %v70 = vld [vmem:[%s2 + $0xac] sm:$0xf]
    %v71 = vld [vmem:[%s2 + $0xb0] sm:$0xf]
    %v72 = vld [vmem:[%s2 + $0xb4] sm:$0xf]
    %v73 = vld [vmem:[%s2 + $0xb8] sm:$0xf]
    %v74 = vld [vmem:[%s2 + $0xbc] sm:$0xf]
    %v75 = vld [vmem:[%s2 + $0xc0] sm:$0xf]
    %v76 = vld [vmem:[%s2 + $0xc4] sm:$0xf]
    %v77 = vld [vmem:[%s2 + $0xc8] sm:$0xf]
    %v78 = vld [vmem:[%s2 + $0xcc] sm:$0xf]
    %v79 = vld [vmem:[%s2 + $0xd0] sm:$0xf]
    %v80 = vld [vmem:[%s2 + $0xd4] sm:$0xf]
    %v81 = vld [vmem:[%s2 + $0xd8] sm:$0xf]
    %v82 = vld [vmem:[%s2 + $0xdc] sm:$0xf]
    %v83 = vld [vmem:[%s2 + $0xe0] sm:$0xf]
    %v84 = vld [vmem:[%s2 + $0xe4] sm:$0xf]
    %v85 = vld [vmem:[%s2 + $0xe8] sm:$0xf]
    %v86 = vld [vmem:[%s2 + $0xec] sm:$0xf]
    %v87 = vld [vmem:[%s2 + $0xf0] sm:$0xf]
    %v88 = vld [vmem:[%s2 + $0xf4] sm:$0xf]
    %v89 = vld [vmem:[%s2 + $0xf8] sm:$0xf]
    %v90 = vld [vmem:[%s2 + $0xfc] sm:$0xf]
    %v91 = vld [vmem:[%s2 + $0x100] sm:$0xf]
    %v92 = vld [vmem:[%s2 + $0x104] sm:$0xf]
    %v93 = vld [vmem:[%s2 + $0x108] sm:$0xf]
    %v94 = vld [vmem:[%s2 + $0x10c] sm:$0xf]
    %v95 = vld [vmem:[%s2 + $0x110] sm:$0xf]
    %v96 = vld [vmem:[%s2 + $0x114] sm:$0xf]
    %v97 = vld [vmem:[%s2 + $0x118] sm:$0xf]
    %v98 = vld [vmem:[%s2 + $0x11c] sm:$0xf]
    %v99 = vld [vmem:[%s2 + $0x120] sm:$0xf]
    %v100 = vld [vmem:[%s2 + $0x124] sm:$0xf]
    %v101 = vld [vmem:[%s2 + $0x128] sm:$0xf]
    %v102 = vld [vmem:[%s2 + $0x12c] sm:$0xf]
    %v103 = vld [vmem:[%s2 + $0x130] sm:$0xf]
    %v104 = vld [vmem:[%s2 + $0x134] sm:$0xf]
    %v105 = vld [vmem:[%s2 + $0x138] sm:$0xf]
    %v106 = vld [vmem:[%s2 + $0x13c] sm:$0xf]
    %v107 = vld [vmem:[%s2 + $0x140] sm:$0xf]
    %v108 = vld [vmem:[%s2 + $0x144] sm:$0xf]
    %v109 = vld [vmem:[%s2 + $0x148] sm:$0xf]
    %v110 = vld [vmem:[%s2 + $0x14c] sm:$0xf]
    %v111 = vld [vmem:[%s2 + $0x150] sm:$0xf]
    %v112 = vld [vmem:[%s2 + $0x154] sm:$0xf]
    %v113 = vld [vmem:[%s2 + $0x158] sm:$0xf]
    %v114 = vld [vmem:[%s2 + $0x15c] sm:$0xf]
    %v115 = vld [vmem:[%s2 + $0x160] sm:$0xf]
    %v116 = vld [vmem:[%s2 + $0x164] sm:$0xf]
    %v117 = vld [vmem:[%s2 + $0x168] sm:$0xf]
    %v118 = vld [vmem:[%s2 + $0x16c] sm:$0xf]
    %v119 = vld [vmem:[%s2 + $0x170] sm:$0xf]
    %v120 = vld [vmem:[%s2 + $0x174] sm:$0xf]
    %v121 = vld [vmem:[%s2 + $0x178] sm:$0xf]
    %v122 = vld [vmem:[%s2 + $0x17c] sm:$0xf]
    %v123 = vld [vmem:[%s2 + $0x180] sm:$0xf]
    %v124 = vld [vmem:[%s2 + $0x184] sm:$0xf]
    %v125 = vld [vmem:[%s2 + $0x188] sm:$0xf]
    %v126 = vld [vmem:[%s2 + $0x18c] sm:$0xf]
    %v127 = vld [vmem:[%s2 + $0x190] sm:$0xf]
    %v128 = vld [vmem:[%s2 + $0x194] sm:$0xf]
    %v129 = vld [vmem:[%s2 + $0x198] sm:$0xf]
    %v130 = vld [vmem:[%s2 + $0x19c] sm:$0xf]
    %v131 = vld [vmem:[%s2 + $0x1a0] sm:$0xf]
    %v132 = vld [vmem:[%s2 + $0x1a4] sm:$0xf]
    %v133 = vld [vmem:[%s2 + $0x1a8] sm:$0xf]
    %v134 = vld [vmem:[%s2 + $0x1ac] sm:$0xf]
    %v135 = vld [vmem:[%s2 + $0x1b0] sm:$0xf]
    %v136 = vld [vmem:[%s2 + $0x1b4] sm:$0xf]
    %v137 = vld [vmem:[%s2 + $0x1b8] sm:$0xf]
    %v138 = vld [vmem:[%s2 + $0x1bc] sm:$0xf]
    %v139 = vld [vmem:[%s2 + $0x1c0] sm:$0xf]
    %v140 = vld [vmem:[%s2 + $0x1c4] sm:$0xf]
    %v141 = vld [vmem:[%s2 + $0x1c8] sm:$0xf]
    %v142 = vld [vmem:[%s2 + $0x1cc] sm:$0xf]
    %v143 = vld [vmem:[%s2 + $0x1d0] sm:$0xf]
    %v144 = vld [vmem:[%s2 + $0x1d4] sm:$0xf]
    %v145 = vld [vmem:[%s2 + $0x1d8] sm:$0xf]
    %v146 = vld [vmem:[%s2 + $0x1dc] sm:$0xf]
    %v147 = vld [vmem:[%s2 + $0x1e0] sm:$0xf]
    %v148 = vld [vmem:[%s2 + $0x1e4] sm:$0xf]
    %v149 = vld [vmem:[%s2 + $0x1e8] sm:$0xf]
    %v150 = vld [vmem:[%s2 + $0x1ec] sm:$0xf]
    %v151 = vld [vmem:[%s2 + $0x1f0] sm:$0xf]
    %v152 = vld [vmem:[%s2 + $0x1f4] sm:$0xf]
    %v153 = vld [vmem:[%s2 + $0x1f8] sm:$0xf]
    %v154 = vld [vmem:[%s2 + $0x1fc] sm:$0xf]
    %v155 = vld [vmem:[%s3] sm:$0x1]
    %v160 = vcombine.high %v19, %v19
    %v161 = vcombine.high %v20, %v20
    %v162 = vcombine.high %v21, %v21
    %v163 = vcombine.high %v22, %v22
    %v168 = vpack.c.bf16 %v19, %v19
    %v169 = vpack.c.bf16 %v160, %v160
    %v170 = vpack.c.bf16 %v20, %v20
    %v171 = vpack.c.bf16 %v161, %v161
    %v172 = vpack.c.bf16 %v21, %v21
    %v173 = vpack.c.bf16 %v162, %v162
    %v174 = vpack.c.bf16 %v22, %v22
    %v175 = vpack.c.bf16 %v163, %v163
    %v177 = vlaneseq
    %v178 = vshrl.u32 %v177, 7
    %v179 = vsub.s32 0, %v178
    %v180 = vrot.slane %v155, %v179
    %v310 = vunpack.c.l.b16 %v27
    %v311 = vunpack.c.l.b16 %v28
    %v312 = vunpack.c.l.b16 %v29
    %v313 = vunpack.c.l.b16 %v30
    %v314 = vunpack.c.l.b16 %v31
    %v315 = vunpack.c.l.b16 %v32
    %v316 = vunpack.c.l.b16 %v33
    %v317 = vunpack.c.l.b16 %v34
    %v318 = vunpack.c.l.b16 %v35
    %v319 = vunpack.c.l.b16 %v36
    %v320 = vunpack.c.l.b16 %v37
    %v321 = vunpack.c.l.b16 %v38
    %v322 = vunpack.c.l.b16 %v39
    %v323 = vunpack.c.l.b16 %v40
    %v324 = vunpack.c.l.b16 %v41
    %v325 = vunpack.c.l.b16 %v42
    %v326 = vunpack.c.l.b16 %v43
    %v327 = vunpack.c.l.b16 %v44
    %v328 = vunpack.c.l.b16 %v45
    %v329 = vunpack.c.l.b16 %v46
    %v330 = vunpack.c.l.b16 %v47
    %v331 = vunpack.c.l.b16 %v48
    %v332 = vunpack.c.l.b16 %v49
    %v333 = vunpack.c.l.b16 %v50
    %v334 = vunpack.c.l.b16 %v51
    %v335 = vunpack.c.l.b16 %v52
    %v336 = vunpack.c.l.b16 %v53
    %v337 = vunpack.c.l.b16 %v54
    %v338 = vunpack.c.l.b16 %v55
    %v339 = vunpack.c.l.b16 %v56
    %v340 = vunpack.c.l.b16 %v57
    %v341 = vunpack.c.l.b16 %v58
    %v342 = vunpack.c.l.b16 %v59
    %v343 = vunpack.c.l.b16 %v60
    %v344 = vunpack.c.l.b16 %v61
    %v345 = vunpack.c.l.b16 %v62
    %v346 = vunpack.c.l.b16 %v63
    %v347 = vunpack.c.l.b16 %v64
    %v348 = vunpack.c.l.b16 %v65
    %v349 = vunpack.c.l.b16 %v66
    %v350 = vunpack.c.l.b16 %v67
    %v351 = vunpack.c.l.b16 %v68
    %v352 = vunpack.c.l.b16 %v69
    %v353 = vunpack.c.l.b16 %v70
    %v354 = vunpack.c.l.b16 %v71
    %v355 = vunpack.c.l.b16 %v72
    %v356 = vunpack.c.l.b16 %v73
    %v357 = vunpack.c.l.b16 %v74
    %v358 = vunpack.c.l.b16 %v75
    %v359 = vunpack.c.l.b16 %v76
    %v360 = vunpack.c.l.b16 %v77
    %v361 = vunpack.c.l.b16 %v78
    %v362 = vunpack.c.l.b16 %v79
    %v363 = vunpack.c.l.b16 %v80
    %v364 = vunpack.c.l.b16 %v81
    %v365 = vunpack.c.l.b16 %v82
    %v366 = vunpack.c.l.b16 %v83
    %v367 = vunpack.c.l.b16 %v84
    %v368 = vunpack.c.l.b16 %v85
    %v369 = vunpack.c.l.b16 %v86
    %v370 = vunpack.c.l.b16 %v87
    %v371 = vunpack.c.l.b16 %v88
    %v372 = vunpack.c.l.b16 %v89
    %v373 = vunpack.c.l.b16 %v90
    %v374 = vunpack.c.l.b16 %v91
    %v375 = vunpack.c.l.b16 %v92
    %v376 = vunpack.c.l.b16 %v93
    %v377 = vunpack.c.l.b16 %v94
    %v378 = vunpack.c.l.b16 %v95
    %v379 = vunpack.c.l.b16 %v96
    %v380 = vunpack.c.l.b16 %v97
    %v381 = vunpack.c.l.b16 %v98
    %v382 = vunpack.c.l.b16 %v99
    %v383 = vunpack.c.l.b16 %v100
    %v384 = vunpack.c.l.b16 %v101
    %v385 = vunpack.c.l.b16 %v102
    %v386 = vunpack.c.l.b16 %v103
    %v387 = vunpack.c.l.b16 %v104
    %v388 = vunpack.c.l.b16 %v105
    %v389 = vunpack.c.l.b16 %v106
    %v390 = vunpack.c.l.b16 %v107
    %v391 = vunpack.c.l.b16 %v108
    %v392 = vunpack.c.l.b16 %v109
    %v393 = vunpack.c.l.b16 %v110
    %v394 = vunpack.c.l.b16 %v111
    %v395 = vunpack.c.l.b16 %v112
    %v396 = vunpack.c.l.b16 %v113
    %v397 = vunpack.c.l.b16 %v114
    %v398 = vunpack.c.l.b16 %v115
    %v399 = vunpack.c.l.b16 %v116
    %v400 = vunpack.c.l.b16 %v117
    %v401 = vunpack.c.l.b16 %v118
    %v402 = vunpack.c.l.b16 %v119
    %v403 = vunpack.c.l.b16 %v120
    %v404 = vunpack.c.l.b16 %v121
    %v405 = vunpack.c.l.b16 %v122
    %v406 = vunpack.c.l.b16 %v123
    %v407 = vunpack.c.l.b16 %v124
    %v408 = vunpack.c.l.b16 %v125
    %v409 = vunpack.c.l.b16 %v126
    %v410 = vunpack.c.l.b16 %v127
    %v411 = vunpack.c.l.b16 %v128
    %v412 = vunpack.c.l.b16 %v129
    %v413 = vunpack.c.l.b16 %v130
    %v414 = vunpack.c.l.b16 %v131
    %v415 = vunpack.c.l.b16 %v132
    %v416 = vunpack.c.l.b16 %v133
    %v417 = vunpack.c.l.b16 %v134
    %v418 = vunpack.c.l.b16 %v135
    %v419 = vunpack.c.l.b16 %v136
    %v420 = vunpack.c.l.b16 %v137
    %v421 = vunpack.c.l.b16 %v138
    %v422 = vunpack.c.l.b16 %v139
    %v423 = vunpack.c.l.b16 %v140
    %v424 = vunpack.c.l.b16 %v141
    %v425 = vunpack.c.l.b16 %v142
    %v426 = vunpack.c.l.b16 %v143
    %v427 = vunpack.c.l.b16 %v144
    %v428 = vunpack.c.l.b16 %v145
    %v429 = vunpack.c.l.b16 %v146
    %v430 = vunpack.c.l.b16 %v147
    %v431 = vunpack.c.l.b16 %v148
    %v432 = vunpack.c.l.b16 %v149
    %v433 = vunpack.c.l.b16 %v150
    %v434 = vunpack.c.l.b16 %v151
    %v435 = vunpack.c.l.b16 %v152
    %v436 = vunpack.c.l.b16 %v153
    %v437 = vunpack.c.l.b16 %v154
    %v438 = vpack.c.b16 %v311, %v310
    %v439 = vpack.c.b16 %v313, %v312
    %v440 = vpack.c.b16 %v315, %v314
    %v441 = vpack.c.b16 %v317, %v316
    %v442 = vpack.c.b16 %v319, %v318
    %v443 = vpack.c.b16 %v321, %v320
    %v444 = vpack.c.b16 %v323, %v322
    %v445 = vpack.c.b16 %v325, %v324
    %v446 = vpack.c.b16 %v327, %v326
    %v447 = vpack.c.b16 %v329, %v328
    %v448 = vpack.c.b16 %v331, %v330
    %v449 = vpack.c.b16 %v333, %v332
    %v450 = vpack.c.b16 %v335, %v334
    %v451 = vpack.c.b16 %v337, %v336
    %v452 = vpack.c.b16 %v339, %v338
    %v453 = vpack.c.b16 %v341, %v340
    %v454 = vpack.c.b16 %v343, %v342
    %v455 = vpack.c.b16 %v345, %v344
    %v456 = vpack.c.b16 %v347, %v346
    %v457 = vpack.c.b16 %v349, %v348
    %v458 = vpack.c.b16 %v351, %v350
    %v459 = vpack.c.b16 %v353, %v352
    %v460 = vpack.c.b16 %v355, %v354
    %v461 = vpack.c.b16 %v357, %v356
    %v462 = vpack.c.b16 %v359, %v358
    %v463 = vpack.c.b16 %v361, %v360
    %v464 = vpack.c.b16 %v363, %v362
    %v465 = vpack.c.b16 %v365, %v364
    %v466 = vpack.c.b16 %v367, %v366
    %v467 = vpack.c.b16 %v369, %v368
    %v468 = vpack.c.b16 %v371, %v370
    %v469 = vpack.c.b16 %v373, %v372
    %v470 = vpack.c.b16 %v375, %v374
    %v471 = vpack.c.b16 %v377, %v376
    %v472 = vpack.c.b16 %v379, %v378
    %v473 = vpack.c.b16 %v381, %v380
    %v474 = vpack.c.b16 %v383, %v382
    %v475 = vpack.c.b16 %v385, %v384
    %v476 = vpack.c.b16 %v387, %v386
    %v477 = vpack.c.b16 %v389, %v388
    %v478 = vpack.c.b16 %v391, %v390
    %v479 = vpack.c.b16 %v393, %v392
    %v480 = vpack.c.b16 %v395, %v394
    %v481 = vpack.c.b16 %v397, %v396
    %v482 = vpack.c.b16 %v399, %v398
    %v483 = vpack.c.b16 %v401, %v400
    %v484 = vpack.c.b16 %v403, %v402
    %v485 = vpack.c.b16 %v405, %v404
    %v486 = vpack.c.b16 %v407, %v406
    %v487 = vpack.c.b16 %v409, %v408
    %v488 = vpack.c.b16 %v411, %v410
    %v489 = vpack.c.b16 %v413, %v412
    %v490 = vpack.c.b16 %v415, %v414
    %v491 = vpack.c.b16 %v417, %v416
    %v492 = vpack.c.b16 %v419, %v418
    %v493 = vpack.c.b16 %v421, %v420
    %v494 = vpack.c.b16 %v423, %v422
    %v495 = vpack.c.b16 %v425, %v424
    %v496 = vpack.c.b16 %v427, %v426
    %v497 = vpack.c.b16 %v429, %v428
    %v498 = vpack.c.b16 %v431, %v430
    %v499 = vpack.c.b16 %v433, %v432
    %v500 = vpack.c.b16 %v435, %v434
    %v501 = vpack.c.b16 %v437, %v436
    %566 = vmatprep.subr.bf16.mxu0 0
    %567 = vmatpush1.bf16.msra.mxu0 %v438
    %568 = vmatprep.subr.bf16.mxu0 0
    %569 = vmatpush1.bf16.msra.mxu0 %v439
    %570 = vmatprep.subr.bf16.mxu0 0
    %571 = vmatpush1.bf16.msra.mxu0 %v440
    %572 = vmatprep.subr.bf16.mxu0 0
    %573 = vmatpush1.bf16.msra.mxu0 %v441
    %574 = vmatprep.subr.bf16.mxu0 0
    %575 = vmatpush1.bf16.msra.mxu0 %v442
    %576 = vmatprep.subr.bf16.mxu0 0
    %577 = vmatpush1.bf16.msra.mxu0 %v443
    %578 = vmatprep.subr.bf16.mxu0 0
    %579 = vmatpush1.bf16.msra.mxu0 %v444
    %580 = vmatprep.subr.bf16.mxu0 0
    %581 = vmatpush1.bf16.msra.mxu0 %v445
    %582 = vmatprep.subr.bf16.mxu0 0
    %583 = vmatpush1.bf16.msra.mxu0 %v446
    %584 = vmatprep.subr.bf16.mxu0 0
    %585 = vmatpush1.bf16.msra.mxu0 %v447
    %586 = vmatprep.subr.bf16.mxu0 0
    %587 = vmatpush1.bf16.msra.mxu0 %v448
    %588 = vmatprep.subr.bf16.mxu0 0
    %589 = vmatpush1.bf16.msra.mxu0 %v449
    %590 = vmatprep.subr.bf16.mxu0 0
    %591 = vmatpush1.bf16.msra.mxu0 %v450
    %592 = vmatprep.subr.bf16.mxu0 0
    %593 = vmatpush1.bf16.msra.mxu0 %v451
    %594 = vmatprep.subr.bf16.mxu0 0
    %595 = vmatpush1.bf16.msra.mxu0 %v452
    %596 = vmatprep.subr.bf16.mxu0 0
    %597 = vmatpush1.bf16.msra.mxu0 %v453
    %598 = vmatprep.mubr.bf16.mxu0 %v169
    %599 = vmatmul.mubr.bf16.gmra.mrb[0].mxu0 %v168
    %v600 = vpop.f32.mrb[0].mxu0
    %v601 = vadd.f32 %v180, %v600
    %v602 = vpop.f32.mrb[0].mxu0
    %v603 = vpop.f32.mrb[0].mxu0
    %v604 = vpop.f32.mrb[0].mxu0
    %605 = vdwg.mxu0
    %606 = vmatprep.subr.bf16.mxu0 0
    %607 = vmatpush1.bf16.msra.mxu0 %v454
    %608 = vmatprep.subr.bf16.mxu0 0
    %609 = vmatpush1.bf16.msra.mxu0 %v455
    %610 = vmatprep.subr.bf16.mxu0 0
    %611 = vmatpush1.bf16.msra.mxu0 %v456
    %612 = vmatprep.subr.bf16.mxu0 0
    %613 = vmatpush1.bf16.msra.mxu0 %v457
    %614 = vmatprep.subr.bf16.mxu0 0
    %615 = vmatpush1.bf16.msra.mxu0 %v458
    %616 = vmatprep.subr.bf16.mxu0 0
    %617 = vmatpush1.bf16.msra.mxu0 %v459
    %618 = vmatprep.subr.bf16.mxu0 0
    %619 = vmatpush1.bf16.msra.mxu0 %v460
    %620 = vmatprep.subr.bf16.mxu0 0
    %621 = vmatpush1.bf16.msra.mxu0 %v461
    %622 = vmatprep.subr.bf16.mxu0 0
    %623 = vmatpush1.bf16.msra.mxu0 %v462
    %624 = vmatprep.subr.bf16.mxu0 0
    %625 = vmatpush1.bf16.msra.mxu0 %v463
    %626 = vmatprep.subr.bf16.mxu0 0
    %627 = vmatpush1.bf16.msra.mxu0 %v464
    %628 = vmatprep.subr.bf16.mxu0 0
    %629 = vmatpush1.bf16.msra.mxu0 %v465
    %630 = vmatprep.subr.bf16.mxu0 0
    %631 = vmatpush1.bf16.msra.mxu0 %v466
    %632 = vmatprep.subr.bf16.mxu0 0
    %633 = vmatpush1.bf16.msra.mxu0 %v467
    %634 = vmatprep.subr.bf16.mxu0 0
    %635 = vmatpush1.bf16.msra.mxu0 %v468
    %636 = vmatprep.subr.bf16.mxu0 0
    %637 = vmatpush1.bf16.msra.mxu0 %v469
    %638 = vmatprep.mubr.bf16.mxu0 %v171
    %639 = vmatmul.mubr.bf16.gmra.mrb[0].mxu0 %v170
    %v640 = vpop.f32.mrb[0].mxu0
    %v641 = vadd.f32 %v601, %v640
    %v642 = vpop.f32.mrb[0].mxu0
    %v643 = vpop.f32.mrb[0].mxu0
    %v644 = vpop.f32.mrb[0].mxu0
    %645 = vdwg.mxu0
    %646 = vmatprep.subr.bf16.mxu0 0
    %647 = vmatpush1.bf16.msra.mxu0 %v470
    %648 = vmatprep.subr.bf16.mxu0 0
    %649 = vmatpush1.bf16.msra.mxu0 %v471
    %650 = vmatprep.subr.bf16.mxu0 0
    %651 = vmatpush1.bf16.msra.mxu0 %v472
    %652 = vmatprep.subr.bf16.mxu0 0
    %653 = vmatpush1.bf16.msra.mxu0 %v473
    %654 = vmatprep.subr.bf16.mxu0 0
    %655 = vmatpush1.bf16.msra.mxu0 %v474
    %656 = vmatprep.subr.bf16.mxu0 0
    %657 = vmatpush1.bf16.msra.mxu0 %v475
    %658 = vmatprep.subr.bf16.mxu0 0
    %659 = vmatpush1.bf16.msra.mxu0 %v476
    %660 = vmatprep.subr.bf16.mxu0 0
    %661 = vmatpush1.bf16.msra.mxu0 %v477
    %662 = vmatprep.subr.bf16.mxu0 0
    %663 = vmatpush1.bf16.msra.mxu0 %v478
    %664 = vmatprep.subr.bf16.mxu0 0
    %665 = vmatpush1.bf16.msra.mxu0 %v479
    %666 = vmatprep.subr.bf16.mxu0 0
    %667 = vmatpush1.bf16.msra.mxu0 %v480
    %668 = vmatprep.subr.bf16.mxu0 0
    %669 = vmatpush1.bf16.msra.mxu0 %v481
    %670 = vmatprep.subr.bf16.mxu0 0
    %671 = vmatpush1.bf16.msra.mxu0 %v482
    %672 = vmatprep.subr.bf16.mxu0 0
    %673 = vmatpush1.bf16.msra.mxu0 %v483
    %674 = vmatprep.subr.bf16.mxu0 0
    %675 = vmatpush1.bf16.msra.mxu0 %v484
    %676 = vmatprep.subr.bf16.mxu0 0
    %677 = vmatpush1.bf16.msra.mxu0 %v485
    %678 = vmatprep.mubr.bf16.mxu0 %v173
    %679 = vmatmul.mubr.bf16.gmra.mrb[0].mxu0 %v172
    %v680 = vpop.f32.mrb[0].mxu0
    %v681 = vadd.f32 %v641, %v680
    %v682 = vpop.f32.mrb[0].mxu0
    %v683 = vpop.f32.mrb[0].mxu0
    %v684 = vpop.f32.mrb[0].mxu0
    %685 = vdwg.mxu0
    %686 = vmatprep.subr.bf16.mxu0 0
    %687 = vmatpush1.bf16.msra.mxu0 %v486
    %688 = vmatprep.subr.bf16.mxu0 0
    %689 = vmatpush1.bf16.msra.mxu0 %v487
    %690 = vmatprep.subr.bf16.mxu0 0
    %691 = vmatpush1.bf16.msra.mxu0 %v488
    %692 = vmatprep.subr.bf16.mxu0 0
    %693 = vmatpush1.bf16.msra.mxu0 %v489
    %694 = vmatprep.subr.bf16.mxu0 0
    %695 = vmatpush1.bf16.msra.mxu0 %v490
    %696 = vmatprep.subr.bf16.mxu0 0
    %697 = vmatpush1.bf16.msra.mxu0 %v491
    %698 = vmatprep.subr.bf16.mxu0 0
    %699 = vmatpush1.bf16.msra.mxu0 %v492
    %700 = vmatprep.subr.bf16.mxu0 0
    %701 = vmatpush1.bf16.msra.mxu0 %v493
    %702 = vmatprep.subr.bf16.mxu0 0
    %703 = vmatpush1.bf16.msra.mxu0 %v494
    %704 = vmatprep.subr.bf16.mxu0 0
    %705 = vmatpush1.bf16.msra.mxu0 %v495
    %706 = vmatprep.subr.bf16.mxu0 0
    %707 = vmatpush1.bf16.msra.mxu0 %v496
    %708 = vmatprep.subr.bf16.mxu0 0
    %709 = vmatpush1.bf16.msra.mxu0 %v497
    %710 = vmatprep.subr.bf16.mxu0 0
    %711 = vmatpush1.bf16.msra.mxu0 %v498
    %712 = vmatprep.subr.bf16.mxu0 0
    %713 = vmatpush1.bf16.msra.mxu0 %v499
    %714 = vmatprep.subr.bf16.mxu0 0
    %715 = vmatpush1.bf16.msra.mxu0 %v500
    %716 = vmatprep.subr.bf16.mxu0 0
    %717 = vmatpush1.bf16.msra.mxu0 %v501
    %718 = vmatprep.mubr.bf16.mxu0 %v175
    %719 = vmatmul.mubr.bf16.gmra.mrb[0].mxu0 %v174
    %v720 = vpop.f32.mrb[0].mxu0
    %v721 = vadd.f32 %v681, %v720
    %v722 = vpop.f32.mrb[0].mxu0
    %v723 = vpop.f32.mrb[0].mxu0
    %v724 = vpop.f32.mrb[0].mxu0
    %725 = vdwg.mxu0
    %v730 = vcombine.high %v23, %v23
    %v731 = vcombine.high %v24, %v24
    %v732 = vcombine.high %v25, %v25
    %v733 = vcombine.high %v26, %v26
    %v738 = vpack.c.bf16 %v23, %v23
    %v739 = vpack.c.bf16 %v730, %v730
    %v740 = vpack.c.bf16 %v24, %v24
    %v741 = vpack.c.bf16 %v731, %v731
    %v742 = vpack.c.bf16 %v25, %v25
    %v743 = vpack.c.bf16 %v732, %v732
    %v744 = vpack.c.bf16 %v26, %v26
    %v745 = vpack.c.bf16 %v733, %v733
    %746 = vmatprep.subr.bf16.mxu0 0
    %747 = vmatpush1.bf16.msra.mxu0 %v438
    %748 = vmatprep.subr.bf16.mxu0 0
    %749 = vmatpush1.bf16.msra.mxu0 %v439
    %750 = vmatprep.subr.bf16.mxu0 0
    %751 = vmatpush1.bf16.msra.mxu0 %v440
    %752 = vmatprep.subr.bf16.mxu0 0
    %753 = vmatpush1.bf16.msra.mxu0 %v441
    %754 = vmatprep.subr.bf16.mxu0 0
    %755 = vmatpush1.bf16.msra.mxu0 %v442
    %756 = vmatprep.subr.bf16.mxu0 0
    %757 = vmatpush1.bf16.msra.mxu0 %v443
    %758 = vmatprep.subr.bf16.mxu0 0
    %759 = vmatpush1.bf16.msra.mxu0 %v444
    %760 = vmatprep.subr.bf16.mxu0 0
    %761 = vmatpush1.bf16.msra.mxu0 %v445
    %762 = vmatprep.subr.bf16.mxu0 0
    %763 = vmatpush1.bf16.msra.mxu0 %v446
    %764 = vmatprep.subr.bf16.mxu0 0
    %765 = vmatpush1.bf16.msra.mxu0 %v447
    %766 = vmatprep.subr.bf16.mxu0 0
    %767 = vmatpush1.bf16.msra.mxu0 %v448
    %768 = vmatprep.subr.bf16.mxu0 0
    %769 = vmatpush1.bf16.msra.mxu0 %v449
    %770 = vmatprep.subr.bf16.mxu0 0
    %771 = vmatpush1.bf16.msra.mxu0 %v450
    %772 = vmatprep.subr.bf16.mxu0 0
    %773 = vmatpush1.bf16.msra.mxu0 %v451
    %774 = vmatprep.subr.bf16.mxu0 0
    %775 = vmatpush1.bf16.msra.mxu0 %v452
    %776 = vmatprep.subr.bf16.mxu0 0
    %777 = vmatpush1.bf16.msra.mxu0 %v453
    %778 = vmatprep.mubr.bf16.mxu0 %v739
    %779 = vmatmul.mubr.bf16.gmra.mrb[0].mxu0 %v738
    %v780 = vpop.f32.mrb[0].mxu0
    %v781 = vadd.f32 %v180, %v780
    %v782 = vpop.f32.mrb[0].mxu0
    %v783 = vpop.f32.mrb[0].mxu0
    %v784 = vpop.f32.mrb[0].mxu0
    %785 = vdwg.mxu0
    %786 = vmatprep.subr.bf16.mxu0 0
    %787 = vmatpush1.bf16.msra.mxu0 %v454
    %788 = vmatprep.subr.bf16.mxu0 0
    %789 = vmatpush1.bf16.msra.mxu0 %v455
    %790 = vmatprep.subr.bf16.mxu0 0
    %791 = vmatpush1.bf16.msra.mxu0 %v456
    %792 = vmatprep.subr.bf16.mxu0 0
    %793 = vmatpush1.bf16.msra.mxu0 %v457
    %794 = vmatprep.subr.bf16.mxu0 0
    %795 = vmatpush1.bf16.msra.mxu0 %v458
    %796 = vmatprep.subr.bf16.mxu0 0
    %797 = vmatpush1.bf16.msra.mxu0 %v459
    %798 = vmatprep.subr.bf16.mxu0 0
    %799 = vmatpush1.bf16.msra.mxu0 %v460
    %800 = vmatprep.subr.bf16.mxu0 0
    %801 = vmatpush1.bf16.msra.mxu0 %v461
    %802 = vmatprep.subr.bf16.mxu0 0
    %803 = vmatpush1.bf16.msra.mxu0 %v462
    %804 = vmatprep.subr.bf16.mxu0 0
    %805 = vmatpush1.bf16.msra.mxu0 %v463
    %806 = vmatprep.subr.bf16.mxu0 0
    %807 = vmatpush1.bf16.msra.mxu0 %v464
    %808 = vmatprep.subr.bf16.mxu0 0
    %809 = vmatpush1.bf16.msra.mxu0 %v465
    %810 = vmatprep.subr.bf16.mxu0 0
    %811 = vmatpush1.bf16.msra.mxu0 %v466
    %812 = vmatprep.subr.bf16.mxu0 0
    %813 = vmatpush1.bf16.msra.mxu0 %v467
    %814 = vmatprep.subr.bf16.mxu0 0
    %815 = vmatpush1.bf16.msra.mxu0 %v468
    %816 = vmatprep.subr.bf16.mxu0 0
    %817 = vmatpush1.bf16.msra.mxu0 %v469
    %818 = vmatprep.mubr.bf16.mxu0 %v741
    %819 = vmatmul.mubr.bf16.gmra.mrb[0].mxu0 %v740
    %v820 = vpop.f32.mrb[0].mxu0
    %v821 = vadd.f32 %v781, %v820
    %v822 = vpop.f32.mrb[0].mxu0
    %v823 = vpop.f32.mrb[0].mxu0
    %v824 = vpop.f32.mrb[0].mxu0
    %825 = vdwg.mxu0
    %826 = vmatprep.subr.bf16.mxu0 0
    %827 = vmatpush1.bf16.msra.mxu0 %v470
    %828 = vmatprep.subr.bf16.mxu0 0
    %829 = vmatpush1.bf16.msra.mxu0 %v471
    %830 = vmatprep.subr.bf16.mxu0 0
    %831 = vmatpush1.bf16.msra.mxu0 %v472
    %832 = vmatprep.subr.bf16.mxu0 0
    %833 = vmatpush1.bf16.msra.mxu0 %v473
    %834 = vmatprep.subr.bf16.mxu0 0
    %835 = vmatpush1.bf16.msra.mxu0 %v474
    %836 = vmatprep.subr.bf16.mxu0 0
    %837 = vmatpush1.bf16.msra.mxu0 %v475
    %838 = vmatprep.subr.bf16.mxu0 0
    %839 = vmatpush1.bf16.msra.mxu0 %v476
    %840 = vmatprep.subr.bf16.mxu0 0
    %841 = vmatpush1.bf16.msra.mxu0 %v477
    %842 = vmatprep.subr.bf16.mxu0 0
    %843 = vmatpush1.bf16.msra.mxu0 %v478
    %844 = vmatprep.subr.bf16.mxu0 0
    %845 = vmatpush1.bf16.msra.mxu0 %v479
    %846 = vmatprep.subr.bf16.mxu0 0
    %847 = vmatpush1.bf16.msra.mxu0 %v480
    %848 = vmatprep.subr.bf16.mxu0 0
    %849 = vmatpush1.bf16.msra.mxu0 %v481
    %850 = vmatprep.subr.bf16.mxu0 0
    %851 = vmatpush1.bf16.msra.mxu0 %v482
    %852 = vmatprep.subr.bf16.mxu0 0
    %853 = vmatpush1.bf16.msra.mxu0 %v483
    %854 = vmatprep.subr.bf16.mxu0 0
    %855 = vmatpush1.bf16.msra.mxu0 %v484
    %856 = vmatprep.subr.bf16.mxu0 0
    %857 = vmatpush1.bf16.msra.mxu0 %v485
    %858 = vmatprep.mubr.bf16.mxu0 %v743
    %859 = vmatmul.mubr.bf16.gmra.mrb[0].mxu0 %v742
    %v860 = vpop.f32.mrb[0].mxu0
    %v861 = vadd.f32 %v821, %v860
    %v862 = vpop.f32.mrb[0].mxu0
    %v863 = vpop.f32.mrb[0].mxu0
    %v864 = vpop.f32.mrb[0].mxu0
    %865 = vdwg.mxu0
    %866 = vmatprep.subr.bf16.mxu0 0
    %867 = vmatpush1.bf16.msra.mxu0 %v486
    %868 = vmatprep.subr.bf16.mxu0 0
    %869 = vmatpush1.bf16.msra.mxu0 %v487
    %870 = vmatprep.subr.bf16.mxu0 0
    %871 = vmatpush1.bf16.msra.mxu0 %v488
    %872 = vmatprep.subr.bf16.mxu0 0
    %873 = vmatpush1.bf16.msra.mxu0 %v489
    %874 = vmatprep.subr.bf16.mxu0 0
    %875 = vmatpush1.bf16.msra.mxu0 %v490
    %876 = vmatprep.subr.bf16.mxu0 0
    %877 = vmatpush1.bf16.msra.mxu0 %v491
    %878 = vmatprep.subr.bf16.mxu0 0
    %879 = vmatpush1.bf16.msra.mxu0 %v492
    %880 = vmatprep.subr.bf16.mxu0 0
    %881 = vmatpush1.bf16.msra.mxu0 %v493
    %882 = vmatprep.subr.bf16.mxu0 0
    %883 = vmatpush1.bf16.msra.mxu0 %v494
    %884 = vmatprep.subr.bf16.mxu0 0
    %885 = vmatpush1.bf16.msra.mxu0 %v495
    %886 = vmatprep.subr.bf16.mxu0 0
    %887 = vmatpush1.bf16.msra.mxu0 %v496
    %888 = vmatprep.subr.bf16.mxu0 0
    %889 = vmatpush1.bf16.msra.mxu0 %v497
    %890 = vmatprep.subr.bf16.mxu0 0
    %891 = vmatpush1.bf16.msra.mxu0 %v498
    %892 = vmatprep.subr.bf16.mxu0 0
    %893 = vmatpush1.bf16.msra.mxu0 %v499
    %894 = vmatprep.subr.bf16.mxu0 0
    %895 = vmatpush1.bf16.msra.mxu0 %v500
    %896 = vmatprep.subr.bf16.mxu0 0
    %897 = vmatpush1.bf16.msra.mxu0 %v501
    %898 = vmatprep.mubr.bf16.mxu0 %v745
    %899 = vmatmul.mubr.bf16.gmra.mrb[0].mxu0 %v744
    %v900 = vpop.f32.mrb[0].mxu0
    %v901 = vadd.f32 %v861, %v900
    %v902 = vpop.f32.mrb[0].mxu0
    %v903 = vpop.f32.mrb[0].mxu0
    %v904 = vpop.f32.mrb[0].mxu0
    %905 = vdwg.mxu0
    %vm906 = vcmask 76800
    %v907 = vsel %vm906, %v721, -inf
    %908 = vmax.xlane.f32.xlu0 %v907
    %v909 = vpop.xlane.xlu0 %908
    %v910 = vlaneseq
    %v911 = vand.u32 %v910, 127
    %vm912 = vcmp.eq.f32.partialorder %v721, %v909
    %v913 = vsel %vm912, %v911, 1073741824
    %v914 = vsel %vm906, %v913, 2147483647
    %v915 = vand.u32 %v914, 65535
    %v916 = vshra.s32 %v914, 16
    %v917 = vcvt.s32.f32 %v915
    %v918 = vcvt.s32.f32 %v916
    %919 = vmin.xlane.f32.xlu0 %v918
    %v920 = vpop.xlane.xlu0 %919
    %vm921 = vcmp.eq.f32.partialorder %v918, %v920
    %v922 = vsel %vm921, %v917, inf
    %923 = vmin.xlane.f32.xlu0 %v922
    %v924 = vpop.xlane.xlu0 %923
    %v925 = vcvt.f32.s32 %v924
    %v926 = vcvt.f32.s32 %v920
    %v927 = vshll.u32 %v926, 16
    %v928 = vadd.s32 %v927, %v925
    %vm929 = vcmp.eq.s32.totalorder %v911, %v928
    %v930 = vsel %vm929, 1, 0
    %v931 = vcvt.s32.f32 %v930
    %v932 = vmul.f32 %v901, %v931
    %v933 = vsel %vm906, %v932, 0.0
    %934 = vadd.xlane.f32.xlu0 %v933
    %v935 = vpop.xlane.xlu0 %934
    %v936 = vsub.f32 %v909, %v721
    %v937 = vsub.f32 %v935, %v901
    %v938 = vsub.f32 %v936, %v937
    %v939 = vand.u32 2147483647, %v938
    %v940 = vsel %vm906, %v939, -inf
    %941 = vmax.xlane.f32.xlu0 %v940
    %v942 = vpop.xlane.xlu0 %941
    %v943 = vsub.f32 %v19, %v23
    %v944 = vsub.f32 %v20, %v24
    %v945 = vsub.f32 %v21, %v25
    %v946 = vsub.f32 %v22, %v26
    %v947 = vmul.f32 %v943, %v943
    %v948 = vmul.f32 %v944, %v944
    %v949 = vmul.f32 %v945, %v945
    %v950 = vmul.f32 %v946, %v946
    %v955 = vcombine.high %v947, %v947
    %v956 = vcombine.high %v948, %v948
    %v957 = vcombine.high %v949, %v949
    %v958 = vcombine.high %v950, %v950
    %vm963 = vcmask 1043456
    %v964 = vsel %vm963, %v947, 0.0
    %v965 = vsel %vm963, %v955, 0.0
    %v966 = vadd.f32 %v964, %v965
    %v967 = vsel %vm963, %v948, 0.0
    %v968 = vadd.f32 %v966, %v967
    %v969 = vsel %vm963, %v956, 0.0
    %v970 = vadd.f32 %v968, %v969
    %v971 = vsel %vm963, %v949, 0.0
    %v972 = vadd.f32 %v970, %v971
    %v973 = vsel %vm963, %v957, 0.0
    %v974 = vadd.f32 %v972, %v973
    %v975 = vsel %vm963, %v950, 0.0
    %v976 = vadd.f32 %v974, %v975
    %v977 = vsel %vm963, %v958, 0.0
    %v978 = vadd.f32 %v976, %v977
    %979 = vadd.xlane.f32.xlu0 %v978
    %v980 = vpop.xlane.xlu0 %979
    %v981 = vrsqrt.pop %v980
    %v982 = vmul.f32 %v942, %v981
    %v983 = vsub.f32 0.0, %v982
    %984 = vst [vmem:[#allocation2] sm:$0xf] %v983
    // Predicated region
    $region18: #{tpu_custom_call.1} parent=1 // pred_check
      _
    $region19: #{tpu_custom_call.1} parent=1 // pred_check_branch
      %986 = sbr.rel (0) target = $region21
    $region20: #{tpu_custom_call.1} parent=1 // pred_region
      %s988 = ssub.s32 64, 64
      %989 = vsyncadd [#allocation3], %s988
      %s991 = sshll.u32 [#allocation2], 4
      %s992 = int_to_ptr.vmem [resolvable:$true] %s991
      %994 = dma.vmem_to_hbm [thread:$0]  %s992, 64, %s4, [#allocation3]
    $region21: #{tpu_custom_call.1} parent=1 // pred_fallthru
      _
    // Predicated region
    $region22: #{tpu_custom_call.1} parent=1 // pred_check
      _
    $region23: #{tpu_custom_call.1} parent=1 // pred_check_branch
      %996 = sbr.rel (0) target = $region25
    $region24: #{tpu_custom_call.1} parent=1 // pred_region
      %997 = dma.done [#allocation3], 64
    $region25: #{tpu_custom_call.1} parent=1 // pred_fallthru
      _
    %998 = vsyncpa [#allocation3], 1

</llo_original>
